<compile_context>
chip_gen: v7x
topology: tpu7x:2x2x1
jax: 0.10.0
libtpu: 0.0.40
codegen_flags: <defaults>
</compile_context>

<pallas_src>
import functools

import jax
import jax.numpy as jnp
from jax import lax
from jax.experimental import pallas as pl
from jax.experimental.pallas import tpu as pltpu

LRELU_SLOPE = 0.2


# ---------------------------------------------------------------------------
# Kernel 1: conv tile  y = W^T(nout_p,K) @ X(K,tile_hw) + bias,
#           fused with per-tile BatchNorm partial stats (sum, centered SSQ).
# ---------------------------------------------------------------------------
def _conv_bias_stats_kernel(xT_ref, wT_ref, b_ref, conv_ref, s_ref, m2_ref):
    # xT_ref : (1, K, tn)         im2col-transposed input tile (K = 16*nin)
    # wT_ref : (nout_p, K)        weight matrix, resident across the grid
    # b_ref  : (nout_p, 1)        bias column, f32
    # conv_ref: (1, nout_p, tn)   conv+bias tile, channels in sublanes
    # s_ref / m2_ref : (1, 1, nout_p, 128)  per-tile partial BN stats (f32)
    nout_p, tn = conv_ref.shape[1], conv_ref.shape[2]

    y = jnp.dot(wT_ref[...], xT_ref[0],
                preferred_element_type=jnp.float32)          # (nout_p, tn) f32
    y = y + b_ref[...]                                        # lane-broadcast bias

    y_q = y.astype(conv_ref.dtype)
    conv_ref[0] = y_q

    # BN partial stats on exactly the values kernel 2 will read back.
    ys = y_q.astype(jnp.float32)
    tile_sum = jnp.sum(ys, axis=1, keepdims=True)             # (nout_p, 1)
    tile_mean = tile_sum * (1.0 / tn)
    d = ys - tile_mean
    tile_m2 = jnp.sum(d * d, axis=1, keepdims=True)           # centered SSQ
    s_ref[0, 0] = jnp.broadcast_to(tile_sum, (nout_p, 128))
    m2_ref[0, 0] = jnp.broadcast_to(tile_m2, (nout_p, 128))


# ---------------------------------------------------------------------------
# Kernel 2: z = y * scale + shift  ->  LeakyReLU(0.2)   (channels-in-sublane)
# ---------------------------------------------------------------------------
def _bn_lrelu_kernel(y_ref, scale_ref, shift_ref, o_ref):
    z = y_ref[0].astype(jnp.float32) * scale_ref[...] + shift_ref[...]
    o_ref[0] = jnp.where(z > 0, z, LRELU_SLOPE * z).astype(o_ref.dtype)


# ---------------------------------------------------------------------------
# Glue helpers (cheap XLA layout transforms).
# ---------------------------------------------------------------------------
def _round_up(x, m):
    return (x + m - 1) // m * m


def _pick_hw_tile(hw, nout_p, max_acc_bytes=128 * 1024):
    """Largest lane tile in {512,256,128} dividing hw with a bounded f32 acc."""
    divisible = [t for t in (512, 256, 128) if hw % t == 0]
    for t in divisible:
        if nout_p * t * 4 <= max_acc_bytes:
            return t
    return divisible[-1] if divisible else hw


def _pick_hw_tile2(hw):
    for t in (2048, 1024, 512, 256, 128):
        if hw % t == 0:
            return t
    return hw


def _vmem_limit_bytes():
    """Generation-aware scoped-VMEM limit (v7x: 64 MiB/TC, v5e/v6e: 128 MiB)."""
    try:
        cap = int(pltpu.get_tpu_info().vmem_capacity_bytes)
    except Exception:
        cap = 128 * 1024 * 1024
    return int(min(max(cap * 3 // 4, 16 * 1024 * 1024), 96 * 1024 * 1024))


def _im2col_T(x, hout, wout):
    """(B, C, H, W) -> (B, 16*C, Hout*Wout) for the 4x4/stride-2/pad-1 conv.
    K index = c*16 + ki*4 + kj, matching weight.reshape(nout, nin*16)."""
    b, c, h, w = x.shape
    xp = jnp.pad(x, ((0, 0), (0, 0), (1, 1), (1, 1)))
    taps = []
    for ki in range(4):
        for kj in range(4):
            taps.append(xp[:, :, ki:ki + 2 * hout - 1:2, kj:kj + 2 * wout - 1:2])
    p = jnp.stack(taps, axis=2)                       # (B, C, 16, Hout, Wout)
    return p.reshape(b, c * 16, hout * wout)


# ---------------------------------------------------------------------------
# Forward pass
# ---------------------------------------------------------------------------
@functools.partial(jax.jit, static_argnames=("eps", "compute_dtype"))
def dcgan_conv_forward(x, weight, bias, gamma, beta, eps=1e-5,
                       compute_dtype=jnp.bfloat16):
    """x: (B, nin, H, W) f32 NCHW -> (B, nout, H//2, W//2) f32 NCHW."""
    b, nin, h, w = x.shape
    nout = weight.shape[0]
    assert h % 2 == 0 and w % 2 == 0, "Conv2d(4, 2, 1) expects even spatial dims"
    hout, wout = h // 2, w // 2
    hw = hout * wout
    k = 16 * nin
    nout_p = _round_up(nout, 8)                       # channels live in sublanes

    # --- glue: im2col-T input slab, (nout_p, K) weight, bias column ----------
    xT = _im2col_T(x, hout, wout).astype(compute_dtype)        # (B, K, HW)
    wT = weight.reshape(nout, k)
    if nout_p > nout:
        wT = jnp.pad(wT, ((0, nout_p - nout), (0, 0)))
    wT = wT.astype(compute_dtype)                              # (nout_p, K)
    b_col = jnp.pad(bias, (0, nout_p - nout)).reshape(nout_p, 1).astype(jnp.float32)

    cparams = pltpu.CompilerParams(
        dimension_semantics=("parallel", "parallel"),          # v7x megacore
        vmem_limit_bytes=_vmem_limit_bytes(),
    )

    tn1 = _pick_hw_tile(hw, nout_p)
    t1 = hw // tn1
    # TODO(synk): pipeline_mode=pl.Buffered(1) on the grid-invariant wT/b blocks
    # would halve their VMEM footprint on the largest layers; skipped here for
    # lowering robustness (those blocks are only KiB..few-MiB at DCGAN sizes).

    conv, s_part, m2_part = pl.pallas_call(
        _conv_bias_stats_kernel,
        out_shape=(
            jax.ShapeDtypeStruct((b, nout_p, hw), compute_dtype),
            jax.ShapeDtypeStruct((b, t1, nout_p, 128), jnp.float32),
            jax.ShapeDtypeStruct((b, t1, nout_p, 128), jnp.float32),
        ),
        grid_spec=pltpu.PrefetchScalarGridSpec(
            num_scalar_prefetch=0,
            grid=(b, t1),
            in_specs=[
                pl.BlockSpec((1, k, tn1), lambda i, j: (i, 0, j)),
                pl.BlockSpec((nout_p, k), lambda i, j: (0, 0)),
                pl.BlockSpec((nout_p, 1), lambda i, j: (0, 0)),
            ],
            out_specs=[
                pl.BlockSpec((1, nout_p, tn1), lambda i, j: (i, 0, j)),
                pl.BlockSpec((1, 1, nout_p, 128), lambda i, j: (i, j, 0, 0)),
                pl.BlockSpec((1, 1, nout_p, 128), lambda i, j: (i, j, 0, 0)),
            ],
        ),
        compiler_params=cparams,
    )(xT, wT, b_col)

    # --- tiny f32 glue: parallel-Welford combine of per-tile stats -----------
    count = jnp.float32(b * hw)
    s = s_part[..., 0]                                # (B, T1, nout_p)
    m2 = m2_part[..., 0]
    mean = jnp.sum(s, axis=(0, 1)) / count            # (nout_p,)
    tile_mean = s / jnp.float32(tn1)
    m2_tot = jnp.sum(m2, axis=(0, 1)) + jnp.float32(tn1) * jnp.sum(
        (tile_mean - mean) ** 2, axis=(0, 1))
    var = jnp.maximum(m2_tot / count, 0.0)
    invstd = lax.rsqrt(var + eps)
    gamma_p = jnp.pad(gamma, (0, nout_p - nout))
    beta_p = jnp.pad(beta, (0, nout_p - nout))
    scale_vec = gamma_p * invstd
    shift_vec = beta_p - mean * scale_vec
    scale = scale_vec.astype(jnp.float32).reshape(nout_p, 1)
    shift = shift_vec.astype(jnp.float32).reshape(nout_p, 1)

    # --- Pallas kernel 2: BN affine + LeakyReLU on the compact slab ----------
    tn2 = _pick_hw_tile2(hw)
    t2 = hw // tn2
    y = pl.pallas_call(
        _bn_lrelu_kernel,
        out_shape=jax.ShapeDtypeStruct((b, nout_p, hw), jnp.float32),
        grid_spec=pltpu.PrefetchScalarGridSpec(
            num_scalar_prefetch=0,
            grid=(b, t2),
            in_specs=[
                pl.BlockSpec((1, nout_p, tn2), lambda i, j: (i, 0, j)),
                pl.BlockSpec((nout_p, 1), lambda i, j: (0, 0)),
                pl.BlockSpec((nout_p, 1), lambda i, j: (0, 0)),
            ],
            out_specs=pl.BlockSpec((1, nout_p, tn2), lambda i, j: (i, 0, j)),
        ),
        compiler_params=cparams,
    )(conv, scale, shift)

    # --- free layout: (B, nout_p, HW) is already NCHW-flat -------------------
    if nout_p != nout:
        y = y[:, :nout, :]
    # TODO(synk): in a fused multi-layer net, hand the (B, C, HW) slab straight
    # to the next dcgan_conv layer instead of reshaping to 4-D here.
    return y.reshape(b, nout, hout, wout)


# ---------------------------------------------------------------------------
# Plain-JAX reference (matches PyTorch dcgan_conv.forward, training-mode BN).
# ---------------------------------------------------------------------------
def _reference(x, weight, bias, gamma, beta, eps=1e-5):
    conv = lax.conv_general_dilated(
        x, weight, window_strides=(2, 2), padding=((1, 1), (1, 1)),
        dimension_numbers=("NCHW", "OIHW", "NCHW"))
    conv = conv + bias[None, :, None, None]
    mean = jnp.mean(conv, axis=(0, 2, 3), keepdims=True)
    var = jnp.mean((conv - mean) ** 2, axis=(0, 2, 3), keepdims=True)
    z = (conv - mean) * lax.rsqrt(var + eps)
    z = z * gamma[None, :, None, None] + beta[None, :, None, None]
    return jnp.where(z > 0, z, LRELU_SLOPE * z)


if __name__ == "__main__":
    key = jax.random.PRNGKey(0)
    k_x, k_w, k_b, k_g, k_be = jax.random.split(key, 5)

    B, NIN, NOUT, H, W = 2, 4, 8, 16, 16

    x = jax.random.normal(k_x, (B, NIN, H, W), dtype=jnp.float32)
    weight = 0.1 * jax.random.normal(k_w, (NOUT, NIN, 4, 4), dtype=jnp.float32)
    bias = 0.1 * jax.random.normal(k_b, (NOUT,), dtype=jnp.float32)
    gamma = 1.0 + 0.1 * jax.random.normal(k_g, (NOUT,), dtype=jnp.float32)
    beta = 0.1 * jax.random.normal(k_be, (NOUT,), dtype=jnp.float32)

    ref = _reference(x, weight, bias, gamma, beta)

    # f32 matmul path: strict check against the XLA conv reference.
    out = jax.block_until_ready(
        dcgan_conv_forward(x, weight, bias, gamma, beta, compute_dtype=jnp.float32))
    assert out.shape == (B, NOUT, H // 2, W // 2), out.shape
    assert jnp.allclose(out, ref, atol=1e-4, rtol=1e-4), \
        float(jnp.max(jnp.abs(out - ref)))

    # bf16 production path (bf16 matmul inputs + bf16 conv slab, f32 stats/math).
    out_bf16 = jax.block_until_ready(
        dcgan_conv_forward(x, weight, bias, gamma, beta, compute_dtype=jnp.bfloat16))
    assert jnp.allclose(out_bf16, ref, atol=5e-2, rtol=5e-2), \
        float(jnp.max(jnp.abs(out_bf16 - ref)))

    print("KERNEL_OK")
</pallas_src>

<mosaic_0001>
module attributes {stable_mosaic.version = 11 : i64} {
  func.func @_conv_bias_stats_kernel(%arg0: i32, %arg1: i32, %arg2: memref<1x64x64xf32, #tpu.memory_space<vmem>>, %arg3: memref<8x64xf32, #tpu.memory_space<vmem>>, %arg4: memref<8x1xf32, #tpu.memory_space<vmem>>, %arg5: memref<1x8x64xf32, #tpu.memory_space<vmem>>, %arg6: memref<1x1x8x128xf32, #tpu.memory_space<vmem>>, %arg7: memref<1x1x8x128xf32, #tpu.memory_space<vmem>>) attributes {dimension_semantics = [#tpu.dimension_semantics<parallel>, #tpu.dimension_semantics<parallel>], iteration_bounds = array<i64: 2, 1>, scalar_prefetch = 0 : i64, scratch_operands = 0 : i64, tpu.core_type = #tpu.core_type<tc>, window_params = [{transform_indices = @transform_0, window_bounds = array<i64: 1, 64, 64>}, {pipeline_mode = #tpu.pipeline_mode<synchronous>, transform_indices = @transform_1, window_bounds = array<i64: 8, 64>}, {pipeline_mode = #tpu.pipeline_mode<synchronous>, transform_indices = @transform_2, window_bounds = array<i64: 8, 1>}, {transform_indices = @transform_3, window_bounds = array<i64: 1, 8, 64>}, {transform_indices = @transform_4, window_bounds = array<i64: 1, 1, 8, 128>}, {transform_indices = @transform_5, window_bounds = array<i64: 1, 1, 8, 128>}]} {
    %c0 = arith.constant 0 : index
    %c0_0 = arith.constant 0 : index
    %0 = vector.load %arg3[%c0, %c0_0] : memref<8x64xf32, #tpu.memory_space<vmem>>, vector<8x64xf32>
    %c0_1 = arith.constant 0 : index
    %c0_2 = arith.constant 0 : index
    %c0_3 = arith.constant 0 : index
    %1 = vector.load %arg2[%c0_1, %c0_2, %c0_3] : memref<1x64x64xf32, #tpu.memory_space<vmem>>, vector<1x64x64xf32>
    %2 = vector.shape_cast %1 : vector<1x64x64xf32> to vector<64x64xf32>
    %cst = arith.constant dense<0.000000e+00> : vector<8x64xf32>
    %3 = tpu.matmul %0, %2, %cst {dimension_numbers = #tpu.dot_dimension_numbers<[1], [0], [0], [1], [0, 0, 1, 1], [], []>} : vector<8x64xf32>, vector<64x64xf32>, vector<8x64xf32> -> vector<8x64xf32>
    %c0_4 = arith.constant 0 : index
    %c0_5 = arith.constant 0 : index
    %4 = vector.load %arg4[%c0_4, %c0_5] : memref<8x1xf32, #tpu.memory_space<vmem>>, vector<8x1xf32>
    %5 = vector.broadcast %4 : vector<8x1xf32> to vector<8x64xf32>
    %6 = arith.addf %3, %5 : vector<8x64xf32>
    %c0_6 = arith.constant 0 : index
    %c0_7 = arith.constant 0 : index
    %c0_8 = arith.constant 0 : index
    %7 = vector.load %arg5[%c0_6, %c0_7, %c0_8] : memref<1x8x64xf32, #tpu.memory_space<vmem>>, vector<1x8x64xf32>
    %8 = vector.shape_cast %7 : vector<1x8x64xf32> to vector<8x64xf32>
    %9 = vector.shape_cast %6 : vector<8x64xf32> to vector<1x8x64xf32>
    tpu.vector_store %arg5[%c0_6, %c0_7, %c0_8], %9 {strides = array<i32>} : memref<1x8x64xf32, #tpu.memory_space<vmem>>, vector<1x8x64xf32>,
    %cst_9 = arith.constant dense<0.000000e+00> : vector<8xf32>
    %10 = vector.multi_reduction <add>, %6, %cst_9 [1] : vector<8x64xf32> to vector<8xf32>
    %11 = vector.shape_cast %10 : vector<8xf32> to vector<8x1xf32>
    %cst_10 = arith.constant 1.562500e-02 : f32
    %12 = vector.broadcast %cst_10 : f32 to vector<8x1xf32>
    %13 = arith.mulf %11, %12 : vector<8x1xf32>
    %14 = vector.broadcast %13 : vector<8x1xf32> to vector<8x64xf32>
    %15 = arith.subf %6, %14 : vector<8x64xf32>
    %16 = arith.mulf %15, %15 : vector<8x64xf32>
    %cst_11 = arith.constant dense<0.000000e+00> : vector<8xf32>
    %17 = vector.multi_reduction <add>, %16, %cst_11 [1] : vector<8x64xf32> to vector<8xf32>
    %18 = vector.shape_cast %17 : vector<8xf32> to vector<8x1xf32>
    %19 = vector.shape_cast %11 : vector<8x1xf32> to vector<8x1xf32>
    %20 = vector.broadcast %19 : vector<8x1xf32> to vector<8x128xf32>
    %c0_12 = arith.constant 0 : index
    %c0_13 = arith.constant 0 : index
    %c0_14 = arith.constant 0 : index
    %c0_15 = arith.constant 0 : index
    %21 = vector.load %arg6[%c0_12, %c0_13, %c0_14, %c0_15] : memref<1x1x8x128xf32, #tpu.memory_space<vmem>>, vector<1x1x8x128xf32>
    %22 = vector.shape_cast %21 : vector<1x1x8x128xf32> to vector<8x128xf32>
    %23 = vector.shape_cast %20 : vector<8x128xf32> to vector<1x1x8x128xf32>
    tpu.vector_store %arg6[%c0_12, %c0_13, %c0_14, %c0_15], %23 {strides = array<i32>} : memref<1x1x8x128xf32, #tpu.memory_space<vmem>>, vector<1x1x8x128xf32>,
    %24 = vector.shape_cast %18 : vector<8x1xf32> to vector<8x1xf32>
    %25 = vector.broadcast %24 : vector<8x1xf32> to vector<8x128xf32>
    %c0_16 = arith.constant 0 : index
    %c0_17 = arith.constant 0 : index
    %c0_18 = arith.constant 0 : index
    %c0_19 = arith.constant 0 : index
    %26 = vector.load %arg7[%c0_16, %c0_17, %c0_18, %c0_19] : memref<1x1x8x128xf32, #tpu.memory_space<vmem>>, vector<1x1x8x128xf32>
    %27 = vector.shape_cast %26 : vector<1x1x8x128xf32> to vector<8x128xf32>
    %28 = vector.shape_cast %25 : vector<8x128xf32> to vector<1x1x8x128xf32>
    tpu.vector_store %arg7[%c0_16, %c0_17, %c0_18, %c0_19], %28 {strides = array<i32>} : memref<1x1x8x128xf32, #tpu.memory_space<vmem>>, vector<1x1x8x128xf32>,
    return
  }
  func.func @transform_0(%arg0: i32, %arg1: i32) -> (i32, i32, i32) {
    %c0_i32 = arith.constant 0 : i32
    %c0_i32_0 = arith.constant 0 : i32
    return %arg0, %c0_i32, %arg1 : i32, i32, i32
  }
  func.func @transform_1(%arg0: i32, %arg1: i32) -> (i32, i32) {
    %c0_i32 = arith.constant 0 : i32
    %c0_i32_0 = arith.constant 0 : i32
    %c0_i32_1 = arith.constant 0 : i32
    return %c0_i32, %c0_i32_0 : i32, i32
  }
  func.func @transform_2(%arg0: i32, %arg1: i32) -> (i32, i32) {
    %c0_i32 = arith.constant 0 : i32
    %c0_i32_0 = arith.constant 0 : i32
    %c0_i32_1 = arith.constant 0 : i32
    return %c0_i32, %c0_i32_0 : i32, i32
  }
  func.func @transform_3(%arg0: i32, %arg1: i32) -> (i32, i32, i32) {
    %c0_i32 = arith.constant 0 : i32
    %c0_i32_0 = arith.constant 0 : i32
    return %arg0, %c0_i32, %arg1 : i32, i32, i32
  }
  func.func @transform_4(%arg0: i32, %arg1: i32) -> (i32, i32, i32, i32) {
    %c0_i32 = arith.constant 0 : i32
    %c0_i32_0 = arith.constant 0 : i32
    %c0_i32_1 = arith.constant 0 : i32
    return %arg0, %arg1, %c0_i32, %c0_i32_0 : i32, i32, i32, i32
  }
  func.func @transform_5(%arg0: i32, %arg1: i32) -> (i32, i32, i32, i32) {
    %c0_i32 = arith.constant 0 : i32
    %c0_i32_0 = arith.constant 0 : i32
    %c0_i32_1 = arith.constant 0 : i32
    return %arg0, %arg1, %c0_i32, %c0_i32_0 : i32, i32, i32, i32
  }
}

module attributes {stable_mosaic.version = 11 : i64} {
  func.func @_bn_lrelu_kernel(%arg0: i32, %arg1: i32, %arg2: memref<1x8x64xf32, #tpu.memory_space<vmem>>, %arg3: memref<8x1xf32, #tpu.memory_space<vmem>>, %arg4: memref<8x1xf32, #tpu.memory_space<vmem>>, %arg5: memref<1x8x64xf32, #tpu.memory_space<vmem>>) attributes {dimension_semantics = [#tpu.dimension_semantics<parallel>, #tpu.dimension_semantics<parallel>], iteration_bounds = array<i64: 2, 1>, scalar_prefetch = 0 : i64, scratch_operands = 0 : i64, tpu.core_type = #tpu.core_type<tc>, window_params = [{transform_indices = @transform_0, window_bounds = array<i64: 1, 8, 64>}, {pipeline_mode = #tpu.pipeline_mode<synchronous>, transform_indices = @transform_1, window_bounds = array<i64: 8, 1>}, {pipeline_mode = #tpu.pipeline_mode<synchronous>, transform_indices = @transform_2, window_bounds = array<i64: 8, 1>}, {transform_indices = @transform_3, window_bounds = array<i64: 1, 8, 64>}]} {
    %c0 = arith.constant 0 : index
    %c0_0 = arith.constant 0 : index
    %c0_1 = arith.constant 0 : index
    %0 = vector.load %arg2[%c0, %c0_0, %c0_1] : memref<1x8x64xf32, #tpu.memory_space<vmem>>, vector<1x8x64xf32>
    %1 = vector.shape_cast %0 : vector<1x8x64xf32> to vector<8x64xf32>
    %c0_2 = arith.constant 0 : index
    %c0_3 = arith.constant 0 : index
    %2 = vector.load %arg3[%c0_2, %c0_3] : memref<8x1xf32, #tpu.memory_space<vmem>>, vector<8x1xf32>
    %3 = vector.broadcast %2 : vector<8x1xf32> to vector<8x64xf32>
    %4 = arith.mulf %1, %3 : vector<8x64xf32>
    %c0_4 = arith.constant 0 : index
    %c0_5 = arith.constant 0 : index
    %5 = vector.load %arg4[%c0_4, %c0_5] : memref<8x1xf32, #tpu.memory_space<vmem>>, vector<8x1xf32>
    %6 = vector.broadcast %5 : vector<8x1xf32> to vector<8x64xf32>
    %7 = arith.addf %4, %6 : vector<8x64xf32>
    %cst = arith.constant 0.000000e+00 : f32
    %8 = vector.broadcast %cst : f32 to vector<8x64xf32>
    %9 = arith.cmpf ogt, %7, %8 : vector<8x64xf32>
    %cst_6 = arith.constant 2.000000e-01 : f32
    %10 = vector.broadcast %cst_6 : f32 to vector<8x64xf32>
    %11 = arith.mulf %10, %7 : vector<8x64xf32>
    %12 = arith.select %9, %7, %11 : vector<8x64xi1>, vector<8x64xf32>
    %c0_7 = arith.constant 0 : index
    %c0_8 = arith.constant 0 : index
    %c0_9 = arith.constant 0 : index
    %13 = vector.load %arg5[%c0_7, %c0_8, %c0_9] : memref<1x8x64xf32, #tpu.memory_space<vmem>>, vector<1x8x64xf32>
    %14 = vector.shape_cast %13 : vector<1x8x64xf32> to vector<8x64xf32>
    %15 = vector.shape_cast %12 : vector<8x64xf32> to vector<1x8x64xf32>
    tpu.vector_store %arg5[%c0_7, %c0_8, %c0_9], %15 {strides = array<i32>} : memref<1x8x64xf32, #tpu.memory_space<vmem>>, vector<1x8x64xf32>,
    return
  }
  func.func @transform_0(%arg0: i32, %arg1: i32) -> (i32, i32, i32) {
    %c0_i32 = arith.constant 0 : i32
    %c0_i32_0 = arith.constant 0 : i32
    return %arg0, %c0_i32, %arg1 : i32, i32, i32
  }
  func.func @transform_1(%arg0: i32, %arg1: i32) -> (i32, i32) {
    %c0_i32 = arith.constant 0 : i32
    %c0_i32_0 = arith.constant 0 : i32
    %c0_i32_1 = arith.constant 0 : i32
    return %c0_i32, %c0_i32_0 : i32, i32
  }
  func.func @transform_2(%arg0: i32, %arg1: i32) -> (i32, i32) {
    %c0_i32 = arith.constant 0 : i32
    %c0_i32_0 = arith.constant 0 : i32
    %c0_i32_1 = arith.constant 0 : i32
    return %c0_i32, %c0_i32_0 : i32, i32
  }
  func.func @transform_3(%arg0: i32, %arg1: i32) -> (i32, i32, i32) {
    %c0_i32 = arith.constant 0 : i32
    %c0_i32_0 = arith.constant 0 : i32
    return %arg0, %c0_i32, %arg1 : i32, i32, i32
  }
}

</mosaic_0001>

<llo_original>
// kernel: dcgan_conv_forward.3
$region0: #{dcgan_conv_forward.3}
  #allocation0 [shape = 'u32[]', space=smem, size = 0x4, offset = 0x4, fixed_abs, tag = 'smem constant byte address 0x4 - core index']
  #allocation1 [shape = 'u32[144,128]{1,0:T(1,128)}', space=vmem, size = 0x12000, scoped, tag = 'internal scratch']
  %s0 = inlined_call_operand.hbm [shape: f32[2,8,64], index: 0, kind: input, shape index: {}]
  %s1 = inlined_call_operand.hbm [shape: f32[8,1], index: 1, kind: input, shape index: {}]
  %s2 = inlined_call_operand.hbm [shape: f32[8,1], index: 2, kind: input, shape index: {}]
  %s3 = inlined_call_operand.hbm [shape: f32[2,8,64], index: 3, kind: output, shape index: {}]
  %s4 = sld [smem:[#allocation0]]
  $region57: #{dcgan_conv_forward.3} parent=0
    _
  %s6 = ssub.s32 1, %s4
  %s7 = scalar_select 0, %s6, %s4
  $region1: #{dcgan_conv_forward.3} parent=0
    #allocation2 [shape = 'u8[8192]{0}', space=vmem, size = 0x2000, scoped, tag = 'input window, operand 0']
    #allocation3 [shape = 's32[2]{0}', space=sflag, size = 0x8, scoped, tag = 'scoped memory for dcgan_conv_forward.3']
    #allocation4 [shape = 's32[2]{0}', space=sflag, size = 0x8, scoped, tag = 'scoped memory for dcgan_conv_forward.3']
    #allocation5 [shape = 'u8[4096]{0}', space=vmem, size = 0x1000, scoped, tag = 'input window, operand 1, single buffered']
    #allocation6 [shape = 's32[1]{0}', space=sflag, size = 0x4, scoped, tag = 'scoped memory for dcgan_conv_forward.3']
    #allocation7 [shape = 'u8[4096]{0}', space=vmem, size = 0x1000, scoped, tag = 'input window, operand 2, single buffered']
    #allocation8 [shape = 'u8[8192]{0}', space=vmem, size = 0x2000, scoped, tag = 'output window, operand 0']
    %8 = vsyncpa [#allocation3], 0
    %s9 = scalar_lea.sflag [#allocation3], 1
    %10 = vsyncpa %s9, 0
    %11 = vsyncpa [#allocation6], 0
    %12 = vsyncpa [#allocation4], 0
    %s13 = scalar_lea.sflag [#allocation4], 1
    %14 = vsyncpa %s13, 0
    loop: start=0, step=1, limit=4
    $region2: #{dcgan_conv_forward.3} parent=1 // loop_pre_header
      _
    $region3: #{dcgan_conv_forward.3} parent=1 // loop_header
      %s16 = sphi 0, %s20
      %p17 = scmp.ge.s32.totalorder %s16, 4
      %s23 = sphi 0, %s35
      %s24 = sphi 0, %s31
      %s25 = sphi 0, %s23
      %s26 = sphi 0, %s24
      %s27 = sphi 0, %s25
      %s28 = sphi 0, %s26
      %s40 = sphi 0, %s42
      %s43 = sphi 0, %s40
      %s44 = sphi 0, %s43
      %s60 = sphi 0, %s44
      %s64 = sphi 0, %s64
      %s66 = sphi 0, %s64
      %s67 = sphi 0, %s66
      %s81 = sphi 0, %s67
      %s85 = sphi 0, %s85
      %s87 = sphi 0, %s85
      %s88 = sphi 0, %s87
      %s102 = sphi 0, %s88
      %s110 = sphi 0, %s112
      %s113 = sphi 0, %s110
      %s114 = sphi 0, %s113
      %s130 = sphi 0, %s114
    $region4: #{dcgan_conv_forward.3} parent=1 // loop_header_branch
      %19 = sbr.rel (%p17) target = $region8
    $region5: #{dcgan_conv_forward.3} parent=1 // loop_body
      %s21 = ssub.s32 %s16, 1
      %s22 = ssub.s32 %s16, 2
      %s29 = sadd.s32 1, %s24
      %p30 = scmp.ge.s32.totalorder %s29, 1
      %s31 = scalar_select %p30, 0, %s29
      %s32 = sadd.s32 1, %s23
      %s33 = scalar_select %p30, %s32, %s23
      %p34 = scmp.ge.s32.totalorder %s33, 2
      %s35 = scalar_select %p34, 0, %s33
      %s36 = ssub.s32 %s23, %s35
      %s37 = ssub.s32 %s24, %s31
      %s38 = sor.u32 %s36, %s37
      %p39 = scmp.eq.s32.totalorder %s38, 0
      %s41 = sadd.s32 %s40, 1
      %s42 = scalar_select %p39, %s40, %s41
      %p45 = pneg %p39
      %p46 = scmp.eq.s32.totalorder %s16, 1
      %p47 = por %p45, %p46
      %p48 = scmp.ne.s32.totalorder %s40, %s43
      %p49 = scmp.eq.s32.totalorder %s16, 0
      %p50 = por %p48, %p49
      %p51 = scmp.ne.s32.totalorder %s40, %s43
      %p52 = scmp.eq.s32.totalorder %s21, 1
      %p53 = por %p51, %p52
      %p54 = scmp.ne.s32.totalorder %s43, %s44
      %p55 = scmp.eq.s32.totalorder %s21, 0
      %p56 = por %p54, %p55
      %p57 = scmp.ne.s32.totalorder %s43, %s44
      %p58 = scmp.eq.s32.totalorder %s22, 1
      %p59 = por %p57, %p58
      %p61 = scmp.ne.s32.totalorder %s44, %s60
      %p62 = scmp.eq.s32.totalorder %s22, 0
      %p63 = por %p61, %p62
      %s65 = sadd.s32 %s64, 1
      %p68 = scmp.eq.s32.totalorder %s16, 1
      %p69 = scmp.ne.s32.totalorder %s64, %s66
      %p70 = scmp.eq.s32.totalorder %s16, 0
      %p71 = por %p69, %p70
      %p72 = scmp.ne.s32.totalorder %s64, %s66
      %p73 = scmp.eq.s32.totalorder %s21, 1
      %p74 = por %p72, %p73
      %p75 = scmp.ne.s32.totalorder %s66, %s67
      %p76 = scmp.eq.s32.totalorder %s21, 0
      %p77 = por %p75, %p76
      %p78 = scmp.ne.s32.totalorder %s66, %s67
      %p79 = scmp.eq.s32.totalorder %s22, 1
      %p80 = por %p78, %p79
      %p82 = scmp.ne.s32.totalorder %s67, %s81
      %p83 = scmp.eq.s32.totalorder %s22, 0
      %p84 = por %p82, %p83
      %s86 = sadd.s32 %s85, 1
      %p89 = scmp.eq.s32.totalorder %s16, 1
      %p90 = scmp.ne.s32.totalorder %s85, %s87
      %p91 = scmp.eq.s32.totalorder %s16, 0
      %p92 = por %p90, %p91
      %p93 = scmp.ne.s32.totalorder %s85, %s87
      %p94 = scmp.eq.s32.totalorder %s21, 1
      %p95 = por %p93, %p94
      %p96 = scmp.ne.s32.totalorder %s87, %s88
      %p97 = scmp.eq.s32.totalorder %s21, 0
      %p98 = por %p96, %p97
      %p99 = scmp.ne.s32.totalorder %s87, %s88
      %p100 = scmp.eq.s32.totalorder %s22, 1
      %p101 = por %p99, %p100
      %p103 = scmp.ne.s32.totalorder %s88, %s102
      %p104 = scmp.eq.s32.totalorder %s22, 0
      %p105 = por %p103, %p104
      %s106 = ssub.s32 %s23, %s35
      %s107 = ssub.s32 %s24, %s31
      %s108 = sor.u32 %s106, %s107
      %p109 = scmp.eq.s32.totalorder %s108, 0
      %s111 = sadd.s32 %s110, 1
      %s112 = scalar_select %p109, %s110, %s111
      %p115 = pneg %p109
      %p116 = scmp.eq.s32.totalorder %s16, 1
      %p117 = por %p115, %p116
      %p118 = scmp.ne.s32.totalorder %s110, %s113
      %p119 = scmp.eq.s32.totalorder %s16, 0
      %p120 = por %p118, %p119
      %p121 = scmp.ne.s32.totalorder %s110, %s113
      %p122 = scmp.eq.s32.totalorder %s21, 1
      %p123 = por %p121, %p122
      %p124 = scmp.ne.s32.totalorder %s113, %s114
      %p125 = scmp.eq.s32.totalorder %s21, 0
      %p126 = por %p124, %p125
      %p127 = scmp.ne.s32.totalorder %s113, %s114
      %p128 = scmp.eq.s32.totalorder %s22, 1
      %p129 = por %p127, %p128
      %p131 = scmp.ne.s32.totalorder %s114, %s130
      %p132 = scmp.eq.s32.totalorder %s22, 0
      %p133 = por %p131, %p132
      %p134 = scmp.le.s32.totalorder 1, %s16
      %p135 = scmp.lt.s32.totalorder %s16, 3
      %p136 = pnand %p134, %p135
      %p137 = pneg %p136
      // Predicated region
      $region9: #{dcgan_conv_forward.3} parent=5 // pred_check
        _
      $region10: #{dcgan_conv_forward.3} parent=5 // pred_check_branch
        %139 = sbr.rel (%p136) target = $region12
      $region11: #{dcgan_conv_forward.3} parent=5 // pred_region
        %s140 = ssub.s32 %s16, 1
        // Predicated region
        $region13: #{dcgan_conv_forward.3} parent=11 // pred_check
          %p141 = pneg %p77
        $region14: #{dcgan_conv_forward.3} parent=11 // pred_check_branch
          %143 = sbr.rel (%p141) target = $region16
        $region15: #{dcgan_conv_forward.3} parent=11 // pred_region
          %s145 = ssub.s32 128, 128
          %146 = vsyncadd [#allocation6], %s145
          %s148 = sshll.u32 [#allocation5], 4
          %s149 = int_to_ptr.vmem [resolvable:$true] %s148
          %151 = dma.hbm_to_vmem [thread:$0]  %s1, 128, %s149, [#allocation6]
        $region16: #{dcgan_conv_forward.3} parent=11 // pred_fallthru
          _
        // Predicated region
        $region17: #{dcgan_conv_forward.3} parent=11 // pred_check
          %p152 = pneg %p98
        $region18: #{dcgan_conv_forward.3} parent=11 // pred_check_branch
          %154 = sbr.rel (%p152) target = $region20
        $region19: #{dcgan_conv_forward.3} parent=11 // pred_region
          %s156 = ssub.s32 128, 128
          %157 = vsyncadd [#allocation6], %s156
          %s159 = sshll.u32 [#allocation7], 4
          %s160 = int_to_ptr.vmem [resolvable:$true] %s159
          %162 = dma.hbm_to_vmem [thread:$0]  %s2, 128, %s160, [#allocation6]
        $region20: #{dcgan_conv_forward.3} parent=11 // pred_fallthru
          _
      $region12: #{dcgan_conv_forward.3} parent=5 // pred_fallthru
        _
      %p163 = scmp.lt.s32.totalorder %s16, 2
      // Predicated region
      $region21: #{dcgan_conv_forward.3} parent=5 // pred_check
        %p164 = pneg %p163
      $region22: #{dcgan_conv_forward.3} parent=5 // pred_check_branch
        %166 = sbr.rel (%p164) target = $region24
      $region23: #{dcgan_conv_forward.3} parent=5 // pred_region
        // Predicated region
        $region25: #{dcgan_conv_forward.3} parent=23 // pred_check
          %p167 = pneg %p50
        $region26: #{dcgan_conv_forward.3} parent=23 // pred_check_branch
          %169 = sbr.rel (%p167) target = $region28
        $region27: #{dcgan_conv_forward.3} parent=23 // pred_region
          %s170 = sand.u32 %s40, 1
          %s171 = scalar_lea.sflag [#allocation3], %s170
          %s172 = sand.u32 %s40, 1
          %s173 = smul.addr %s172, 8
          %s174 = scalar_lea.vmem [#allocation2], %s173
          %s176 = ssub.s32 128, 128
          %177 = vsyncadd %s171, %s176
          %s178 = sadd.s32 %s24, %s23
          %s179 = smul.addr %s178, 128
          %s180 = scalar_lea.hbm %s0, %s179
          %s182 = sshll.u32 %s174, 4
          %s183 = int_to_ptr.vmem [resolvable:$true] %s182
          %185 = dma.hbm_to_vmem [thread:$0]  %s180, 128, %s183, %s171
        $region28: #{dcgan_conv_forward.3} parent=23 // pred_fallthru
          _
      $region24: #{dcgan_conv_forward.3} parent=5 // pred_fallthru
        _
      %p186 = scmp.le.s32.totalorder 1, %s16
      %p187 = scmp.lt.s32.totalorder %s16, 3
      %p188 = pnand %p186, %p187
      %p189 = pneg %p188
      // Predicated region
      $region29: #{dcgan_conv_forward.3} parent=5 // pred_check
        _
      $region30: #{dcgan_conv_forward.3} parent=5 // pred_check_branch
        %191 = sbr.rel (%p188) target = $region32
      $region31: #{dcgan_conv_forward.3} parent=5 // pred_region
        %s192 = ssub.s32 %s16, 1
        %s193 = sand.u32 %s43, 1
        %s194 = scalar_lea.sflag [#allocation3], %s193
        %s195 = sand.u32 %s43, 1
        %s196 = smul.addr %s195, 8
        %s197 = scalar_lea.vmem [#allocation2], %s196
        // Predicated region
        $region33: #{dcgan_conv_forward.3} parent=31 // pred_check
          %p198 = pneg %p56
        $region34: #{dcgan_conv_forward.3} parent=31 // pred_check_branch
          %200 = sbr.rel (%p198) target = $region36
        $region35: #{dcgan_conv_forward.3} parent=31 // pred_region
          %201 = dma.done %s194, 128
        $region36: #{dcgan_conv_forward.3} parent=31 // pred_fallthru
          _
        // Predicated region
        $region37: #{dcgan_conv_forward.3} parent=31 // pred_check
          %p202 = pneg %p77
        $region38: #{dcgan_conv_forward.3} parent=31 // pred_check_branch
          %204 = sbr.rel (%p202) target = $region40
        $region39: #{dcgan_conv_forward.3} parent=31 // pred_region
          %205 = dma.done [#allocation6], 128
        $region40: #{dcgan_conv_forward.3} parent=31 // pred_fallthru
          _
        // Predicated region
        $region41: #{dcgan_conv_forward.3} parent=31 // pred_check
          %p206 = pneg %p98
        $region42: #{dcgan_conv_forward.3} parent=31 // pred_check_branch
          %208 = sbr.rel (%p206) target = $region44
        $region43: #{dcgan_conv_forward.3} parent=31 // pred_region
          %209 = dma.done [#allocation6], 128
        $region44: #{dcgan_conv_forward.3} parent=31 // pred_fallthru
          _
        %s210 = sand.u32 %s43, 1
        %s211 = scalar_lea.sflag [#allocation3], %s210
        %s212 = sand.u32 %s43, 1
        %s213 = smul.addr %s212, 8
        %s214 = scalar_lea.vmem [#allocation2], %s213
        %p215 = pneg %p56
        %p216 = pneg %p53
        %p217 = pneg %p77
        %p218 = pneg %p74
        %p219 = pneg %p98
        %p220 = pneg %p95
        %p221 = pneg %p126
        %p222 = pneg %p123
        %s223 = sand.u32 %s113, 1
        %s224 = scalar_lea.sflag [#allocation4], %s223
        %s225 = sand.u32 %s113, 1
        %s226 = smul.addr %s225, 8
        %s227 = scalar_lea.vmem [#allocation8], %s226
        %v228 = vld [vmem:[%s197] sm:$0xff]
        %v229 = vld [vmem:[#allocation5] sm:$0xff]
        %231 = vset.pattern.permute.xlu0 0
        %232 = vperm.xlu0 %231, %v229
        %v233 = vpop.permute.xlu0 %232
        %v235 = vmul.f32 %v228, %v233
        %v236 = vld [vmem:[#allocation7] sm:$0xff]
        %238 = vset.pattern.permute.xlu0 0
        %239 = vperm.xlu0 %238, %v236
        %v240 = vpop.permute.xlu0 %239
        %v242 = vadd.f32 %v235, %v240
        %vm243 = vcmp.gt.f32.partialorder %v242, 0.0
        %v244 = vmul.f32 %v242, 0.2
        %v245 = vsel %vm243, %v242, %v244
        %vm246 = vcmask 523264
        %247 = vst.msk [vmem:[%s227] sm:$0xff] %vm246, %v245
        %s248 = sand.u32 %s113, 1
        %s249 = scalar_lea.sflag [#allocation4], %s248
        %s250 = sand.u32 %s113, 1
        %s251 = smul.addr %s250, 8
        %s252 = scalar_lea.vmem [#allocation8], %s251
        // Predicated region
        $region45: #{dcgan_conv_forward.3} parent=31 // pred_check
          %p253 = pneg %p123
        $region46: #{dcgan_conv_forward.3} parent=31 // pred_check_branch
          %255 = sbr.rel (%p253) target = $region48
        $region47: #{dcgan_conv_forward.3} parent=31 // pred_region
          %s257 = ssub.s32 128, 128
          %258 = vsyncadd %s249, %s257
          %s259 = sadd.s32 %s26, %s25
          %s260 = smul.addr %s259, 128
          %s261 = scalar_lea.hbm %s3, %s260
          %s263 = sshll.u32 %s252, 4
          %s264 = int_to_ptr.vmem [resolvable:$true] %s263
          %266 = dma.vmem_to_hbm [thread:$0]  %s264, 128, %s261, %s249
        $region48: #{dcgan_conv_forward.3} parent=31 // pred_fallthru
          _
      $region32: #{dcgan_conv_forward.3} parent=5 // pred_fallthru
        _
      %p267 = scmp.le.s32.totalorder 2, %s16
      // Predicated region
      $region49: #{dcgan_conv_forward.3} parent=5 // pred_check
        %p268 = pneg %p267
      $region50: #{dcgan_conv_forward.3} parent=5 // pred_check_branch
        %270 = sbr.rel (%p268) target = $region52
      $region51: #{dcgan_conv_forward.3} parent=5 // pred_region
        %s271 = ssub.s32 %s16, 2
        // Predicated region
        $region53: #{dcgan_conv_forward.3} parent=51 // pred_check
          %p272 = pneg %p129
        $region54: #{dcgan_conv_forward.3} parent=51 // pred_check_branch
          %274 = sbr.rel (%p272) target = $region56
        $region55: #{dcgan_conv_forward.3} parent=51 // pred_region
          %s275 = sand.u32 %s114, 1
          %s276 = scalar_lea.sflag [#allocation4], %s275
          %s277 = sand.u32 %s114, 1
          %s278 = smul.addr %s277, 8
          %s279 = scalar_lea.vmem [#allocation8], %s278
          %280 = dma.done %s276, 128
        $region56: #{dcgan_conv_forward.3} parent=51 // pred_fallthru
          _
      $region52: #{dcgan_conv_forward.3} parent=5 // pred_fallthru
        _
    $region6: #{dcgan_conv_forward.3} parent=1 // loop_footer
      %s20 = sadd.s32 1, %s16
    $region7: #{dcgan_conv_forward.3} parent=1 // loop_footer_branch
      %15 = sbr.rel target = $region3
    $region8: #{dcgan_conv_forward.3} parent=1 // loop_exit
      _
    %281 = vsyncpa [#allocation3], 1
    %s282 = scalar_lea.sflag [#allocation3], 1
    %283 = vsyncpa %s282, 1
    %284 = vsyncpa [#allocation6], 1
    %285 = vsyncpa [#allocation4], 1
    %s286 = scalar_lea.sflag [#allocation4], 1
    %287 = vsyncpa %s286, 1

// kernel: dcgan_conv_forward.2
$region0: #{dcgan_conv_forward.2}
  #allocation0 [shape = 'u32[]', space=smem, size = 0x4, offset = 0x4, fixed_abs, tag = 'smem constant byte address 0x4 - core index']
  #allocation1 [shape = 'u32[144,128]{1,0:T(1,128)}', space=vmem, size = 0x12000, scoped, tag = 'internal scratch']
  %s0 = inlined_call_operand.hbm [shape: f32[2,64,64], index: 0, kind: input, shape index: {}]
  %s1 = inlined_call_operand.hbm [shape: f32[8,64], index: 1, kind: input, shape index: {}]
  %s2 = inlined_call_operand.hbm [shape: f32[8,1], index: 2, kind: input, shape index: {}]
  %s3 = inlined_call_operand.hbm [shape: f32[2,8,64], index: 3, kind: output, shape index: {0}]
  %s4 = inlined_call_operand.hbm [shape: f32[2,1,8,128], index: 4, kind: output, shape index: {1}]
  %s5 = inlined_call_operand.hbm [shape: f32[2,1,8,128], index: 5, kind: output, shape index: {2}]
  %6 = xla_tuple %s3, %s4, %s5
  %s7 = sld [smem:[#allocation0]]
  $region73: #{dcgan_conv_forward.2} parent=0
    _
  %s9 = ssub.s32 1, %s7
  %s10 = scalar_select 0, %s9, %s7
  $region1: #{dcgan_conv_forward.2} parent=0
    #allocation2 [shape = 'u8[65536]{0}', space=vmem, size = 0x10000, scoped, tag = 'input window, operand 0']
    #allocation3 [shape = 's32[2]{0}', space=sflag, size = 0x8, scoped, tag = 'scoped memory for dcgan_conv_forward.2']
    #allocation4 [shape = 's32[2]{0}', space=sflag, size = 0x8, scoped, tag = 'scoped memory for dcgan_conv_forward.2']
    #allocation5 [shape = 'u8[4096]{0}', space=vmem, size = 0x1000, scoped, tag = 'input window, operand 1, single buffered']
    #allocation6 [shape = 's32[1]{0}', space=sflag, size = 0x4, scoped, tag = 'scoped memory for dcgan_conv_forward.2']
    #allocation7 [shape = 'u8[4096]{0}', space=vmem, size = 0x1000, scoped, tag = 'input window, operand 2, single buffered']
    #allocation8 [shape = 'u8[8192]{0}', space=vmem, size = 0x2000, scoped, tag = 'output window, operand 0']
    #allocation9 [shape = 'u8[8192]{0}', space=vmem, size = 0x2000, scoped, tag = 'output window, operand 1']
    #allocation10 [shape = 's32[2]{0}', space=sflag, size = 0x8, scoped, tag = 'scoped memory for dcgan_conv_forward.2']
    #allocation11 [shape = 'u8[8192]{0}', space=vmem, size = 0x2000, scoped, tag = 'output window, operand 2']
    %11 = vsyncpa [#allocation3], 0
    %s12 = scalar_lea.sflag [#allocation3], 1
    %13 = vsyncpa %s12, 0
    %14 = vsyncpa [#allocation6], 0
    %15 = vsyncpa [#allocation4], 0
    %s16 = scalar_lea.sflag [#allocation4], 1
    %17 = vsyncpa %s16, 0
    %18 = vsyncpa [#allocation10], 0
    %s19 = scalar_lea.sflag [#allocation10], 1
    %20 = vsyncpa %s19, 0
    loop: start=0, step=1, limit=4
    $region2: #{dcgan_conv_forward.2} parent=1 // loop_pre_header
      _
    $region3: #{dcgan_conv_forward.2} parent=1 // loop_header
      %s22 = sphi 0, %s26
      %p23 = scmp.ge.s32.totalorder %s22, 4
      %s29 = sphi 0, %s41
      %s30 = sphi 0, %s37
      %s31 = sphi 0, %s29
      %s32 = sphi 0, %s30
      %s33 = sphi 0, %s31
      %s34 = sphi 0, %s32
      %s46 = sphi 0, %s48
      %s49 = sphi 0, %s46
      %s50 = sphi 0, %s49
      %s66 = sphi 0, %s50
      %s70 = sphi 0, %s70
      %s72 = sphi 0, %s70
      %s73 = sphi 0, %s72
      %s87 = sphi 0, %s73
      %s91 = sphi 0, %s91
      %s93 = sphi 0, %s91
      %s94 = sphi 0, %s93
      %s108 = sphi 0, %s94
      %s116 = sphi 0, %s118
      %s119 = sphi 0, %s116
      %s120 = sphi 0, %s119
      %s136 = sphi 0, %s120
      %s144 = sphi 0, %s146
      %s147 = sphi 0, %s144
      %s148 = sphi 0, %s147
      %s164 = sphi 0, %s148
      %s172 = sphi 0, %s174
      %s175 = sphi 0, %s172
      %s176 = sphi 0, %s175
      %s192 = sphi 0, %s176
    $region4: #{dcgan_conv_forward.2} parent=1 // loop_header_branch
      %25 = sbr.rel (%p23) target = $region8
    $region5: #{dcgan_conv_forward.2} parent=1 // loop_body
      %s27 = ssub.s32 %s22, 1
      %s28 = ssub.s32 %s22, 2
      %s35 = sadd.s32 1, %s30
      %p36 = scmp.ge.s32.totalorder %s35, 1
      %s37 = scalar_select %p36, 0, %s35
      %s38 = sadd.s32 1, %s29
      %s39 = scalar_select %p36, %s38, %s29
      %p40 = scmp.ge.s32.totalorder %s39, 2
      %s41 = scalar_select %p40, 0, %s39
      %s42 = ssub.s32 %s29, %s41
      %s43 = ssub.s32 %s30, %s37
      %s44 = sor.u32 %s42, %s43
      %p45 = scmp.eq.s32.totalorder %s44, 0
      %s47 = sadd.s32 %s46, 1
      %s48 = scalar_select %p45, %s46, %s47
      %p51 = pneg %p45
      %p52 = scmp.eq.s32.totalorder %s22, 1
      %p53 = por %p51, %p52
      %p54 = scmp.ne.s32.totalorder %s46, %s49
      %p55 = scmp.eq.s32.totalorder %s22, 0
      %p56 = por %p54, %p55
      %p57 = scmp.ne.s32.totalorder %s46, %s49
      %p58 = scmp.eq.s32.totalorder %s27, 1
      %p59 = por %p57, %p58
      %p60 = scmp.ne.s32.totalorder %s49, %s50
      %p61 = scmp.eq.s32.totalorder %s27, 0
      %p62 = por %p60, %p61
      %p63 = scmp.ne.s32.totalorder %s49, %s50
      %p64 = scmp.eq.s32.totalorder %s28, 1
      %p65 = por %p63, %p64
      %p67 = scmp.ne.s32.totalorder %s50, %s66
      %p68 = scmp.eq.s32.totalorder %s28, 0
      %p69 = por %p67, %p68
      %s71 = sadd.s32 %s70, 1
      %p74 = scmp.eq.s32.totalorder %s22, 1
      %p75 = scmp.ne.s32.totalorder %s70, %s72
      %p76 = scmp.eq.s32.totalorder %s22, 0
      %p77 = por %p75, %p76
      %p78 = scmp.ne.s32.totalorder %s70, %s72
      %p79 = scmp.eq.s32.totalorder %s27, 1
      %p80 = por %p78, %p79
      %p81 = scmp.ne.s32.totalorder %s72, %s73
      %p82 = scmp.eq.s32.totalorder %s27, 0
      %p83 = por %p81, %p82
      %p84 = scmp.ne.s32.totalorder %s72, %s73
      %p85 = scmp.eq.s32.totalorder %s28, 1
      %p86 = por %p84, %p85
      %p88 = scmp.ne.s32.totalorder %s73, %s87
      %p89 = scmp.eq.s32.totalorder %s28, 0
      %p90 = por %p88, %p89
      %s92 = sadd.s32 %s91, 1
      %p95 = scmp.eq.s32.totalorder %s22, 1
      %p96 = scmp.ne.s32.totalorder %s91, %s93
      %p97 = scmp.eq.s32.totalorder %s22, 0
      %p98 = por %p96, %p97
      %p99 = scmp.ne.s32.totalorder %s91, %s93
      %p100 = scmp.eq.s32.totalorder %s27, 1
      %p101 = por %p99, %p100
      %p102 = scmp.ne.s32.totalorder %s93, %s94
      %p103 = scmp.eq.s32.totalorder %s27, 0
      %p104 = por %p102, %p103
      %p105 = scmp.ne.s32.totalorder %s93, %s94
      %p106 = scmp.eq.s32.totalorder %s28, 1
      %p107 = por %p105, %p106
      %p109 = scmp.ne.s32.totalorder %s94, %s108
      %p110 = scmp.eq.s32.totalorder %s28, 0
      %p111 = por %p109, %p110
      %s112 = ssub.s32 %s29, %s41
      %s113 = ssub.s32 %s30, %s37
      %s114 = sor.u32 %s112, %s113
      %p115 = scmp.eq.s32.totalorder %s114, 0
      %s117 = sadd.s32 %s116, 1
      %s118 = scalar_select %p115, %s116, %s117
      %p121 = pneg %p115
      %p122 = scmp.eq.s32.totalorder %s22, 1
      %p123 = por %p121, %p122
      %p124 = scmp.ne.s32.totalorder %s116, %s119
      %p125 = scmp.eq.s32.totalorder %s22, 0
      %p126 = por %p124, %p125
      %p127 = scmp.ne.s32.totalorder %s116, %s119
      %p128 = scmp.eq.s32.totalorder %s27, 1
      %p129 = por %p127, %p128
      %p130 = scmp.ne.s32.totalorder %s119, %s120
      %p131 = scmp.eq.s32.totalorder %s27, 0
      %p132 = por %p130, %p131
      %p133 = scmp.ne.s32.totalorder %s119, %s120
      %p134 = scmp.eq.s32.totalorder %s28, 1
      %p135 = por %p133, %p134
      %p137 = scmp.ne.s32.totalorder %s120, %s136
      %p138 = scmp.eq.s32.totalorder %s28, 0
      %p139 = por %p137, %p138
      %s140 = ssub.s32 %s29, %s41
      %s141 = ssub.s32 %s30, %s37
      %s142 = sor.u32 %s140, %s141
      %p143 = scmp.eq.s32.totalorder %s142, 0
      %s145 = sadd.s32 %s144, 1
      %s146 = scalar_select %p143, %s144, %s145
      %p149 = pneg %p143
      %p150 = scmp.eq.s32.totalorder %s22, 1
      %p151 = por %p149, %p150
      %p152 = scmp.ne.s32.totalorder %s144, %s147
      %p153 = scmp.eq.s32.totalorder %s22, 0
      %p154 = por %p152, %p153
      %p155 = scmp.ne.s32.totalorder %s144, %s147
      %p156 = scmp.eq.s32.totalorder %s27, 1
      %p157 = por %p155, %p156
      %p158 = scmp.ne.s32.totalorder %s147, %s148
      %p159 = scmp.eq.s32.totalorder %s27, 0
      %p160 = por %p158, %p159
      %p161 = scmp.ne.s32.totalorder %s147, %s148
      %p162 = scmp.eq.s32.totalorder %s28, 1
      %p163 = por %p161, %p162
      %p165 = scmp.ne.s32.totalorder %s148, %s164
      %p166 = scmp.eq.s32.totalorder %s28, 0
      %p167 = por %p165, %p166
      %s168 = ssub.s32 %s29, %s41
      %s169 = ssub.s32 %s30, %s37
      %s170 = sor.u32 %s168, %s169
      %p171 = scmp.eq.s32.totalorder %s170, 0
      %s173 = sadd.s32 %s172, 1
      %s174 = scalar_select %p171, %s172, %s173
      %p177 = pneg %p171
      %p178 = scmp.eq.s32.totalorder %s22, 1
      %p179 = por %p177, %p178
      %p180 = scmp.ne.s32.totalorder %s172, %s175
      %p181 = scmp.eq.s32.totalorder %s22, 0
      %p182 = por %p180, %p181
      %p183 = scmp.ne.s32.totalorder %s172, %s175
      %p184 = scmp.eq.s32.totalorder %s27, 1
      %p185 = por %p183, %p184
      %p186 = scmp.ne.s32.totalorder %s175, %s176
      %p187 = scmp.eq.s32.totalorder %s27, 0
      %p188 = por %p186, %p187
      %p189 = scmp.ne.s32.totalorder %s175, %s176
      %p190 = scmp.eq.s32.totalorder %s28, 1
      %p191 = por %p189, %p190
      %p193 = scmp.ne.s32.totalorder %s176, %s192
      %p194 = scmp.eq.s32.totalorder %s28, 0
      %p195 = por %p193, %p194
      %p196 = scmp.le.s32.totalorder 1, %s22
      %p197 = scmp.lt.s32.totalorder %s22, 3
      %p198 = pnand %p196, %p197
      %p199 = pneg %p198
      // Predicated region
      $region9: #{dcgan_conv_forward.2} parent=5 // pred_check
        _
      $region10: #{dcgan_conv_forward.2} parent=5 // pred_check_branch
        %201 = sbr.rel (%p198) target = $region12
      $region11: #{dcgan_conv_forward.2} parent=5 // pred_region
        %s202 = ssub.s32 %s22, 1
        // Predicated region
        $region13: #{dcgan_conv_forward.2} parent=11 // pred_check
          %p203 = pneg %p83
        $region14: #{dcgan_conv_forward.2} parent=11 // pred_check_branch
          %205 = sbr.rel (%p203) target = $region16
        $region15: #{dcgan_conv_forward.2} parent=11 // pred_region
          %s207 = ssub.s32 128, 128
          %208 = vsyncadd [#allocation6], %s207
          %s210 = sshll.u32 [#allocation5], 4
          %s211 = int_to_ptr.vmem [resolvable:$true] %s210
          %213 = dma.hbm_to_vmem [thread:$0]  %s1, 128, %s211, [#allocation6]
        $region16: #{dcgan_conv_forward.2} parent=11 // pred_fallthru
          _
        // Predicated region
        $region17: #{dcgan_conv_forward.2} parent=11 // pred_check
          %p214 = pneg %p104
        $region18: #{dcgan_conv_forward.2} parent=11 // pred_check_branch
          %216 = sbr.rel (%p214) target = $region20
        $region19: #{dcgan_conv_forward.2} parent=11 // pred_region
          %s218 = ssub.s32 128, 128
          %219 = vsyncadd [#allocation6], %s218
          %s221 = sshll.u32 [#allocation7], 4
          %s222 = int_to_ptr.vmem [resolvable:$true] %s221
          %224 = dma.hbm_to_vmem [thread:$0]  %s2, 128, %s222, [#allocation6]
        $region20: #{dcgan_conv_forward.2} parent=11 // pred_fallthru
          _
      $region12: #{dcgan_conv_forward.2} parent=5 // pred_fallthru
        _
      %p225 = scmp.lt.s32.totalorder %s22, 2
      // Predicated region
      $region21: #{dcgan_conv_forward.2} parent=5 // pred_check
        %p226 = pneg %p225
      $region22: #{dcgan_conv_forward.2} parent=5 // pred_check_branch
        %228 = sbr.rel (%p226) target = $region24
      $region23: #{dcgan_conv_forward.2} parent=5 // pred_region
        // Predicated region
        $region25: #{dcgan_conv_forward.2} parent=23 // pred_check
          %p229 = pneg %p56
        $region26: #{dcgan_conv_forward.2} parent=23 // pred_check_branch
          %231 = sbr.rel (%p229) target = $region28
        $region27: #{dcgan_conv_forward.2} parent=23 // pred_region
          %s232 = sand.u32 %s46, 1
          %s233 = scalar_lea.sflag [#allocation3], %s232
          %s234 = sand.u32 %s46, 1
          %s235 = smul.addr %s234, 64
          %s236 = scalar_lea.vmem [#allocation2], %s235
          %s238 = ssub.s32 1024, 1024
          %239 = vsyncadd %s233, %s238
          %s240 = smul.addr %s29, 8
          %s241 = sadd.s32 %s30, %s240
          %s242 = smul.addr %s241, 128
          %s243 = scalar_lea.hbm %s0, %s242
          %s244 = sshll.u32 %s236, 4
          %s245 = int_to_ptr.vmem [resolvable:$true] %s244
          %250 = dma.hbm_to_vmem [thread:$0]  %s243, 1024, %s245, %s233, 128, 128, 8
        $region28: #{dcgan_conv_forward.2} parent=23 // pred_fallthru
          _
      $region24: #{dcgan_conv_forward.2} parent=5 // pred_fallthru
        _
      %p251 = scmp.le.s32.totalorder 1, %s22
      %p252 = scmp.lt.s32.totalorder %s22, 3
      %p253 = pnand %p251, %p252
      %p254 = pneg %p253
      // Predicated region
      $region29: #{dcgan_conv_forward.2} parent=5 // pred_check
        _
      $region30: #{dcgan_conv_forward.2} parent=5 // pred_check_branch
        %256 = sbr.rel (%p253) target = $region32
      $region31: #{dcgan_conv_forward.2} parent=5 // pred_region
        %s257 = ssub.s32 %s22, 1
        %s258 = sand.u32 %s49, 1
        %s259 = scalar_lea.sflag [#allocation3], %s258
        %s260 = sand.u32 %s49, 1
        %s261 = smul.addr %s260, 64
        %s262 = scalar_lea.vmem [#allocation2], %s261
        // Predicated region
        $region33: #{dcgan_conv_forward.2} parent=31 // pred_check
          %p263 = pneg %p62
        $region34: #{dcgan_conv_forward.2} parent=31 // pred_check_branch
          %265 = sbr.rel (%p263) target = $region36
        $region35: #{dcgan_conv_forward.2} parent=31 // pred_region
          %266 = dma.done %s259, 1024
        $region36: #{dcgan_conv_forward.2} parent=31 // pred_fallthru
          _
        // Predicated region
        $region37: #{dcgan_conv_forward.2} parent=31 // pred_check
          %p267 = pneg %p83
        $region38: #{dcgan_conv_forward.2} parent=31 // pred_check_branch
          %269 = sbr.rel (%p267) target = $region40
        $region39: #{dcgan_conv_forward.2} parent=31 // pred_region
          %270 = dma.done [#allocation6], 128
        $region40: #{dcgan_conv_forward.2} parent=31 // pred_fallthru
          _
        // Predicated region
        $region41: #{dcgan_conv_forward.2} parent=31 // pred_check
          %p271 = pneg %p104
        $region42: #{dcgan_conv_forward.2} parent=31 // pred_check_branch
          %273 = sbr.rel (%p271) target = $region44
        $region43: #{dcgan_conv_forward.2} parent=31 // pred_region
          %274 = dma.done [#allocation6], 128
        $region44: #{dcgan_conv_forward.2} parent=31 // pred_fallthru
          _
        %s275 = sand.u32 %s49, 1
        %s276 = scalar_lea.sflag [#allocation3], %s275
        %s277 = sand.u32 %s49, 1
        %s278 = smul.addr %s277, 64
        %s279 = scalar_lea.vmem [#allocation2], %s278
        %p280 = pneg %p62
        %p281 = pneg %p59
        %p282 = pneg %p83
        %p283 = pneg %p80
        %p284 = pneg %p104
        %p285 = pneg %p101
        %p286 = pneg %p132
        %p287 = pneg %p129
        %s288 = sand.u32 %s119, 1
        %s289 = scalar_lea.sflag [#allocation4], %s288
        %s290 = sand.u32 %s119, 1
        %s291 = smul.addr %s290, 8
        %s292 = scalar_lea.vmem [#allocation8], %s291
        %p293 = pneg %p160
        %p294 = pneg %p157
        %s295 = sand.u32 %s27, 1
        %s296 = scalar_lea.sflag [#allocation10], %s295
        %s297 = sand.u32 %s147, 1
        %s298 = smul.addr %s297, 8
        %s299 = scalar_lea.vmem [#allocation9], %s298
        %p300 = pneg %p188
        %p301 = pneg %p185
        %s302 = sand.u32 %s27, 1
        %s303 = scalar_lea.sflag [#allocation10], %s302
        %s304 = sand.u32 %s175, 1
        %s305 = smul.addr %s304, 8
        %s306 = scalar_lea.vmem [#allocation11], %s305
        %v307 = vld [vmem:[#allocation5] sm:$0xff]
        %v308 = vld [vmem:[%s262] sm:$0xff]
        %v309 = vld [vmem:[%s262 + $0x8] sm:$0xff]
        %v310 = vld [vmem:[%s262 + $0x10] sm:$0xff]
        %v311 = vld [vmem:[%s262 + $0x18] sm:$0xff]
        %v312 = vld [vmem:[%s262 + $0x20] sm:$0xff]
        %v313 = vld [vmem:[%s262 + $0x28] sm:$0xff]
        %v314 = vld [vmem:[%s262 + $0x30] sm:$0xff]
        %v315 = vld [vmem:[%s262 + $0x38] sm:$0xff]
        %v316 = vld [vmem:[#allocation7] sm:$0xff]
        %318 = vset.pattern.permute.xlu0 0
        %319 = vperm.xlu0 %318, %v316
        %v320 = vpop.permute.xlu0 %319
        %vm322 = vcmask 523264
        %v324 = vsel %vm322, %v307, 0
        %326 = vmatprep.subr.mxu0 0.0
        %327 = vmatpush1.msra.mxu0 %v308
        %328 = vmatprep.subr.mxu0 0.0
        %329 = vmatpush1.msra.mxu0 %v309
        %330 = vmatprep.subr.mxu0 0.0
        %331 = vmatpush1.msra.mxu0 %v310
        %332 = vmatprep.subr.mxu0 0.0
        %333 = vmatpush1.msra.mxu0 %v311
        %334 = vmatprep.subr.mxu0 0.0
        %335 = vmatpush1.msra.mxu0 %v312
        %336 = vmatprep.subr.mxu0 0.0
        %337 = vmatpush1.msra.mxu0 %v313
        %338 = vmatprep.subr.mxu0 0.0
        %339 = vmatpush1.msra.mxu0 %v314
        %340 = vmatprep.subr.mxu0 0.0
        %341 = vmatpush1.msra.mxu0 %v315
        %342 = vmatprep.subr.mxu0 0.0
        %343 = vmatpush1.msra.mxu0 0.0
        %344 = vmatprep.subr.mxu0 0.0
        %345 = vmatpush1.msra.mxu0 0.0
        %346 = vmatprep.subr.mxu0 0.0
        %347 = vmatpush1.msra.mxu0 0.0
        %348 = vmatprep.subr.mxu0 0.0
        %349 = vmatpush1.msra.mxu0 0.0
        %350 = vmatprep.subr.mxu0 0.0
        %351 = vmatpush1.msra.mxu0 0.0
        %352 = vmatprep.subr.mxu0 0.0
        %353 = vmatpush1.msra.mxu0 0.0
        %354 = vmatprep.subr.mxu0 0.0
        %355 = vmatpush1.msra.mxu0 0.0
        %356 = vmatprep.subr.mxu0 0.0
        %357 = vmatpush1.msra.mxu0 0.0
        %358 = vmatprep.subr.mxu0 0.0
        %359 = vmatpush1.msra.mxu0 0.0
        %360 = vmatprep.subr.mxu0 0.0
        %361 = vmatpush1.msra.mxu0 0.0
        %362 = vmatprep.subr.mxu0 0.0
        %363 = vmatpush1.msra.mxu0 0.0
        %364 = vmatprep.subr.mxu0 0.0
        %365 = vmatpush1.msra.mxu0 0.0
        %366 = vmatprep.subr.mxu0 0.0
        %367 = vmatpush1.msra.mxu0 0.0
        %368 = vmatprep.subr.mxu0 0.0
        %369 = vmatpush1.msra.mxu0 0.0
        %370 = vmatprep.subr.mxu0 0.0
        %371 = vmatpush1.msra.mxu0 0.0
        %372 = vmatprep.subr.mxu0 0.0
        %373 = vmatpush1.msra.mxu0 0.0
        %374 = vmatprep.subr.mxu0 0.0
        %375 = vmatpush1.msra.mxu0 0.0
        %376 = vmatprep.subr.mxu0 0.0
        %377 = vmatpush1.msra.mxu0 0.0
        %378 = vmatprep.subr.mxu0 0.0
        %379 = vmatpush1.msra.mxu0 0.0
        %380 = vmatprep.subr.mxu0 0.0
        %381 = vmatpush1.msra.mxu0 0.0
        %382 = vmatprep.subr.mxu0 0.0
        %383 = vmatpush1.msra.mxu0 0.0
        %384 = vmatprep.subr.mxu0 0.0
        %385 = vmatpush1.msra.mxu0 0.0
        %386 = vmatprep.subr.mxu0 0.0
        %387 = vmatpush1.msra.mxu0 0.0
        %388 = vmatprep.subr.mxu0 0.0
        %389 = vmatpush1.msra.mxu0 0.0
        %390 = vmatprep.mubr.f32.mxu0 0.0
        %391 = vmatmul.mubr.f32.gmra.mrb[0].mxu0 %v324
        %v392 = vpop.f32.mrb[0].mxu0
        %v393 = vadd.f32 %v320, %v392
        %v394 = vpop.f32.mrb[0].mxu0
        %395 = vdwg.mxu0
        %396 = vst.msk [vmem:[%s292] sm:$0xff] %vm322, %v393
        %v397 = vsel %vm322, %v393, 0.0
        %398 = vadd.xlane.f32.xlu0 %v397
        %v399 = vpop.xlane.xlu0 %398
        %v400 = vmul.f32 %v399, 0.015625
        %v401 = vsub.f32 %v393, %v400
        %v402 = vmul.f32 %v401, %v401
        %v403 = vsel %vm322, %v402, 0.0
        %404 = vadd.xlane.f32.xlu0 %v403
        %v405 = vpop.xlane.xlu0 %404
        %406 = vst [vmem:[%s299] sm:$0xff] %v399
        %407 = vst [vmem:[%s306] sm:$0xff] %v405
        %s408 = sand.u32 %s119, 1
        %s409 = scalar_lea.sflag [#allocation4], %s408
        %s410 = sand.u32 %s119, 1
        %s411 = smul.addr %s410, 8
        %s412 = scalar_lea.vmem [#allocation8], %s411
        %s413 = sand.u32 %s27, 1
        %s414 = scalar_lea.sflag [#allocation10], %s413
        %s415 = sand.u32 %s147, 1
        %s416 = smul.addr %s415, 8
        %s417 = scalar_lea.vmem [#allocation9], %s416
        %s418 = sand.u32 %s27, 1
        %s419 = scalar_lea.sflag [#allocation10], %s418
        %s420 = sand.u32 %s175, 1
        %s421 = smul.addr %s420, 8
        %s422 = scalar_lea.vmem [#allocation11], %s421
        // Predicated region
        $region45: #{dcgan_conv_forward.2} parent=31 // pred_check
          %p423 = pneg %p129
        $region46: #{dcgan_conv_forward.2} parent=31 // pred_check_branch
          %425 = sbr.rel (%p423) target = $region48
        $region47: #{dcgan_conv_forward.2} parent=31 // pred_region
          %s427 = ssub.s32 128, 128
          %428 = vsyncadd %s409, %s427
          %s429 = sadd.s32 %s32, %s31
          %s430 = smul.addr %s429, 128
          %s431 = scalar_lea.hbm %s3, %s430
          %s433 = sshll.u32 %s412, 4
          %s434 = int_to_ptr.vmem [resolvable:$true] %s433
          %436 = dma.vmem_to_hbm [thread:$0]  %s434, 128, %s431, %s409
        $region48: #{dcgan_conv_forward.2} parent=31 // pred_fallthru
          _
        // Predicated region
        $region49: #{dcgan_conv_forward.2} parent=31 // pred_check
          %p437 = pneg %p157
        $region50: #{dcgan_conv_forward.2} parent=31 // pred_check_branch
          %439 = sbr.rel (%p437) target = $region52
        $region51: #{dcgan_conv_forward.2} parent=31 // pred_region
          %s441 = ssub.s32 128, 128
          %442 = vsyncadd %s414, %s441
          %s443 = sadd.s32 %s32, %s31
          %s444 = smul.addr %s443, 128
          %s445 = scalar_lea.hbm %s4, %s444
          %s447 = sshll.u32 %s417, 4
          %s448 = int_to_ptr.vmem [resolvable:$true] %s447
          %450 = dma.vmem_to_hbm [thread:$0]  %s448, 128, %s445, %s414
        $region52: #{dcgan_conv_forward.2} parent=31 // pred_fallthru
          _
        // Predicated region
        $region53: #{dcgan_conv_forward.2} parent=31 // pred_check
          %p451 = pneg %p185
        $region54: #{dcgan_conv_forward.2} parent=31 // pred_check_branch
          %453 = sbr.rel (%p451) target = $region56
        $region55: #{dcgan_conv_forward.2} parent=31 // pred_region
          %s455 = ssub.s32 128, 128
          %456 = vsyncadd %s419, %s455
          %s457 = sadd.s32 %s32, %s31
          %s458 = smul.addr %s457, 128
          %s459 = scalar_lea.hbm %s5, %s458
          %s461 = sshll.u32 %s422, 4
          %s462 = int_to_ptr.vmem [resolvable:$true] %s461
          %464 = dma.vmem_to_hbm [thread:$0]  %s462, 128, %s459, %s419
        $region56: #{dcgan_conv_forward.2} parent=31 // pred_fallthru
          _
      $region32: #{dcgan_conv_forward.2} parent=5 // pred_fallthru
        _
      %p465 = scmp.le.s32.totalorder 2, %s22
      // Predicated region
      $region57: #{dcgan_conv_forward.2} parent=5 // pred_check
        %p466 = pneg %p465
      $region58: #{dcgan_conv_forward.2} parent=5 // pred_check_branch
        %468 = sbr.rel (%p466) target = $region60
      $region59: #{dcgan_conv_forward.2} parent=5 // pred_region
        %s469 = ssub.s32 %s22, 2
        // Predicated region
        $region61: #{dcgan_conv_forward.2} parent=59 // pred_check
          %p470 = pneg %p135
        $region62: #{dcgan_conv_forward.2} parent=59 // pred_check_branch
          %472 = sbr.rel (%p470) target = $region64
        $region63: #{dcgan_conv_forward.2} parent=59 // pred_region
          %s473 = sand.u32 %s120, 1
          %s474 = scalar_lea.sflag [#allocation4], %s473
          %s475 = sand.u32 %s120, 1
          %s476 = smul.addr %s475, 8
          %s477 = scalar_lea.vmem [#allocation8], %s476
          %478 = dma.done %s474, 128
        $region64: #{dcgan_conv_forward.2} parent=59 // pred_fallthru
          _
        // Predicated region
        $region65: #{dcgan_conv_forward.2} parent=59 // pred_check
          %p479 = pneg %p163
        $region66: #{dcgan_conv_forward.2} parent=59 // pred_check_branch
          %481 = sbr.rel (%p479) target = $region68
        $region67: #{dcgan_conv_forward.2} parent=59 // pred_region
          %s482 = sand.u32 %s28, 1
          %s483 = scalar_lea.sflag [#allocation10], %s482
          %s484 = sand.u32 %s148, 1
          %s485 = smul.addr %s484, 8
          %s486 = scalar_lea.vmem [#allocation9], %s485
          %487 = dma.done %s483, 128
        $region68: #{dcgan_conv_forward.2} parent=59 // pred_fallthru
          _
        // Predicated region
        $region69: #{dcgan_conv_forward.2} parent=59 // pred_check
          %p488 = pneg %p191
        $region70: #{dcgan_conv_forward.2} parent=59 // pred_check_branch
          %490 = sbr.rel (%p488) target = $region72
        $region71: #{dcgan_conv_forward.2} parent=59 // pred_region
          %s491 = sand.u32 %s28, 1
          %s492 = scalar_lea.sflag [#allocation10], %s491
          %s493 = sand.u32 %s176, 1
          %s494 = smul.addr %s493, 8
          %s495 = scalar_lea.vmem [#allocation11], %s494
          %496 = dma.done %s492, 128
        $region72: #{dcgan_conv_forward.2} parent=59 // pred_fallthru
          _
      $region60: #{dcgan_conv_forward.2} parent=5 // pred_fallthru
        _
    $region6: #{dcgan_conv_forward.2} parent=1 // loop_footer
      %s26 = sadd.s32 1, %s22
    $region7: #{dcgan_conv_forward.2} parent=1 // loop_footer_branch
      %21 = sbr.rel target = $region3
    $region8: #{dcgan_conv_forward.2} parent=1 // loop_exit
      _
    %497 = vsyncpa [#allocation3], 1
    %s498 = scalar_lea.sflag [#allocation3], 1
    %499 = vsyncpa %s498, 1
    %500 = vsyncpa [#allocation6], 1
    %501 = vsyncpa [#allocation4], 1
    %s502 = scalar_lea.sflag [#allocation4], 1
    %503 = vsyncpa %s502, 1
    %504 = vsyncpa [#allocation10], 1
    %s505 = scalar_lea.sflag [#allocation10], 1
    %506 = vsyncpa %s505, 1

</llo_original>
